<compile_context>
chip_gen: v5e
topology: v5e:2x2
jax: 0.10.0
libtpu: 0.0.40
codegen_flags: <defaults>
</compile_context>

<pallas_src>
import functools

import jax
import jax.numpy as jnp
from jax.experimental import pallas as pl
from jax.experimental.pallas import tpu as pltpu

LANE = 128
_VMEM_BUDGET_BYTES = 40 * 1024 * 1024    # conservative: v7x has 64 MiB VMEM / TensorCore
_TARGET_BLOCK_BYTES = 2 * 1024 * 1024    # amortize the ~600-cycle per-grid-step overhead


# ----------------------------- Sum (method='add') -----------------------------

def _sum_kernel(*refs):
    # refs = (in_ref_0, ..., in_ref_{n-1}, out_ref)
    in_refs, out_ref = refs[:-1], refs[-1]
    acc = in_refs[0][...]
    for r in in_refs[1:]:
        acc = acc + r[...]
    out_ref[...] = acc


def _sublane_pack(dtype):
    # sub-32-bit dtypes pack along sublanes: f32 -> 8, bf16 -> 16, int8/fp8 -> 32
    return {4: 8, 2: 16, 1: 32}.get(jnp.dtype(dtype).itemsize, 8)


def _round_up(x, m):
    return ((x + m - 1) // m) * m


def pallas_sum(tensors, *, min_pallas_elements=16 * 1024):
    """Elementwise sum of same-shape, same-dtype arrays (Merge(method='add'))."""
    tensors = list(tensors)
    assert len(tensors) >= 1
    shape = tensors[0].shape
    dtype = tensors[0].dtype
    for t in tensors:
        assert t.shape == shape and t.dtype == dtype
    if len(tensors) == 1:
        return tensors[0]

    total = 1
    for s in shape:
        total *= s

    # Tiny inputs: the pallas_call launch / reshape plumbing costs more than the add.
    if total < min_pallas_elements:
        return functools.reduce(jnp.add, tensors)

    # Flatten to a lane-dense (rows, 128) slab; pad the tail only if strictly needed.
    rows = pl.cdiv(total, LANE)
    pad = rows * LANE - total
    flat = []
    for t in tensors:
        f = t.reshape(-1)
        if pad:
            f = jnp.pad(f, (0, pad))
        flat.append(f.reshape(rows, LANE))

    # Dtype-aware tile size, sized so (N inputs + 1 output) * 2 buffers fits VMEM budget.
    itemsize = jnp.dtype(dtype).itemsize
    pack = _sublane_pack(dtype)
    n_bufs = (len(tensors) + 1) * 2
    block_bytes = min(_TARGET_BLOCK_BYTES,
                      max(64 * 1024, _VMEM_BUDGET_BYTES // n_bufs))
    tile_rows = max(pack, (block_bytes // (LANE * itemsize)) // pack * pack)
    tile_rows = min(tile_rows, _round_up(rows, pack))

    grid_rows = pl.cdiv(rows, tile_rows)  # partial edge block handled (masked) by Pallas
    block_bytes_actual = tile_rows * LANE * itemsize
    vmem_limit = max(16 * 1024 * 1024,
                     min(48 * 1024 * 1024,
                         n_bufs * block_bytes_actual + 4 * 1024 * 1024))

    spec = pl.BlockSpec((tile_rows, LANE), lambda i: (i, 0))
    out = pl.pallas_call(
        _sum_kernel,
        out_shape=jax.ShapeDtypeStruct((rows, LANE), dtype),
        grid_spec=pltpu.PrefetchScalarGridSpec(
            num_scalar_prefetch=0,
            grid=(grid_rows,),
            in_specs=[spec] * len(flat),
            out_specs=spec,
        ),
        compiler_params=pltpu.CompilerParams(
            dimension_semantics=("parallel",),
            vmem_limit_bytes=vmem_limit,
        ),
    )(*flat)

    if pad:
        out = out.reshape(-1)[:total]
    return out.reshape(shape)


# ----------------------------- Cat (method='cat') -----------------------------

def _make_cat_kernel(widths):
    offsets, off = [], 0
    for w in widths:
        offsets.append(off)
        off += w

    def _cat_kernel(*refs):
        in_refs, out_ref = refs[:-1], refs[-1]
        for r, o, w in zip(in_refs, offsets, widths):
            out_ref[:, o:o + w] = r[...]

    return _cat_kernel


def pallas_cat(tensors):
    """Concatenate NCHW-like tensors along dim=1 (Merge(method='cat'))."""
    tensors = list(tensors)
    assert len(tensors) >= 1
    n = tensors[0].shape[0]
    trailing = tensors[0].shape[2:]
    dtype = tensors[0].dtype
    for t in tensors:
        assert t.shape[0] == n and t.shape[2:] == trailing and t.dtype == dtype
    if len(tensors) == 1:
        return tensors[0]

    # Flatten each (N, C_i, *S) -> (N, C_i * prod(S)); concatenating along the last
    # axis and reshaping back is exactly torch.cat(..., dim=1) for contiguous NCHW.
    sp = 1
    for s in trailing:
        sp *= s
    widths = [t.shape[1] * sp for t in tensors]
    total_w = sum(widths)
    total_c = sum(t.shape[1] for t in tensors)
    itemsize = jnp.dtype(dtype).itemsize

    # TODO(synk): tiled Pallas cat for lane-unaligned per-input widths / very large
    # inputs; fall back to XLA's concatenate (pure DMA, already optimal) there.
    if any(w % LANE for w in widths) or (4 * n * total_w * itemsize) > _VMEM_BUDGET_BYTES:
        return jnp.concatenate(tensors, axis=1)

    flat = [t.reshape(n, w) for t, w in zip(tensors, widths)]
    out = pl.pallas_call(
        _make_cat_kernel(widths),
        out_shape=jax.ShapeDtypeStruct((n, total_w), dtype),
        grid_spec=pltpu.PrefetchScalarGridSpec(
            num_scalar_prefetch=0,
            grid=(1,),
            in_specs=[pl.BlockSpec((n, w), lambda i: (0, 0)) for w in widths],
            out_specs=pl.BlockSpec((n, total_w), lambda i: (0, 0)),
        ),
        compiler_params=pltpu.CompilerParams(
            dimension_semantics=("arbitrary",),
        ),
    )(*flat)
    return out.reshape((n, total_c) + tuple(trailing))


# ----------------------------- Merge wrapper -----------------------------

def pallas_merge(tensors, method='cat', **kwargs):
    assert method in ('cat', 'add')
    if method == 'add':
        return pallas_sum(tensors, **kwargs)
    return pallas_cat(tensors)


if __name__ == "__main__":
    key = jax.random.PRNGKey(0)
    k1, k2, k3 = jax.random.split(key, 3)
    # NCHW inputs, small shapes: batch=2, channels=4, H=W=16
    x1 = jax.random.normal(k1, (2, 4, 16, 16), dtype=jnp.float32)
    x2 = jax.random.normal(k2, (2, 4, 16, 16), dtype=jnp.float32)
    x3 = jax.random.normal(k3, (2, 4, 16, 16), dtype=jnp.float32)

    # Merge(method='add'): force the Pallas path even at this tiny test size.
    out_add = pallas_merge([x1, x2, x3], method='add', min_pallas_elements=0)
    out_add = jax.block_until_ready(out_add)
    ref_add = x1 + x2 + x3
    assert out_add.shape == ref_add.shape and out_add.dtype == ref_add.dtype
    assert jnp.allclose(out_add, ref_add, atol=1e-6, rtol=1e-6)

    # Merge(method='cat')
    out_cat = pallas_merge([x1, x2, x3], method='cat')
    out_cat = jax.block_until_ready(out_cat)
    ref_cat = jnp.concatenate([x1, x2, x3], axis=1)
    assert out_cat.shape == ref_cat.shape and out_cat.dtype == ref_cat.dtype
    assert jnp.array_equal(out_cat, ref_cat)

    print("KERNEL_OK")
</pallas_src>

<mosaic_0001>
module attributes {stable_mosaic.version = 11 : i64} {
  func.func @_sum_kernel(%arg0: i32, %arg1: memref<16x128xf32, #tpu.memory_space<vmem>>, %arg2: memref<16x128xf32, #tpu.memory_space<vmem>>, %arg3: memref<16x128xf32, #tpu.memory_space<vmem>>, %arg4: memref<16x128xf32, #tpu.memory_space<vmem>>) attributes {dimension_semantics = [#tpu.dimension_semantics<parallel>], iteration_bounds = array<i64: 1>, scalar_prefetch = 0 : i64, scratch_operands = 0 : i64, tpu.core_type = #tpu.core_type<tc>, window_params = [{transform_indices = @transform_0, window_bounds = array<i64: 16, 128>}, {transform_indices = @transform_1, window_bounds = array<i64: 16, 128>}, {transform_indices = @transform_2, window_bounds = array<i64: 16, 128>}, {transform_indices = @transform_3, window_bounds = array<i64: 16, 128>}]} {
    %c0 = arith.constant 0 : index
    %c0_0 = arith.constant 0 : index
    %0 = vector.load %arg1[%c0, %c0_0] : memref<16x128xf32, #tpu.memory_space<vmem>>, vector<16x128xf32>
    %c0_1 = arith.constant 0 : index
    %c0_2 = arith.constant 0 : index
    %1 = vector.load %arg2[%c0_1, %c0_2] : memref<16x128xf32, #tpu.memory_space<vmem>>, vector<16x128xf32>
    %2 = arith.addf %0, %1 : vector<16x128xf32>
    %c0_3 = arith.constant 0 : index
    %c0_4 = arith.constant 0 : index
    %3 = vector.load %arg3[%c0_3, %c0_4] : memref<16x128xf32, #tpu.memory_space<vmem>>, vector<16x128xf32>
    %4 = arith.addf %2, %3 : vector<16x128xf32>
    %c0_5 = arith.constant 0 : index
    %c0_6 = arith.constant 0 : index
    %5 = vector.load %arg4[%c0_5, %c0_6] : memref<16x128xf32, #tpu.memory_space<vmem>>, vector<16x128xf32>
    tpu.vector_store %arg4[%c0_5, %c0_6], %4 {strides = array<i32>} : memref<16x128xf32, #tpu.memory_space<vmem>>, vector<16x128xf32>,
    return
  }
  func.func @transform_0(%arg0: i32) -> (i32, i32) {
    %c0_i32 = arith.constant 0 : i32
    %c0_i32_0 = arith.constant 0 : i32
    return %arg0, %c0_i32 : i32, i32
  }
  func.func @transform_1(%arg0: i32) -> (i32, i32) {
    %c0_i32 = arith.constant 0 : i32
    %c0_i32_0 = arith.constant 0 : i32
    return %arg0, %c0_i32 : i32, i32
  }
  func.func @transform_2(%arg0: i32) -> (i32, i32) {
    %c0_i32 = arith.constant 0 : i32
    %c0_i32_0 = arith.constant 0 : i32
    return %arg0, %c0_i32 : i32, i32
  }
  func.func @transform_3(%arg0: i32) -> (i32, i32) {
    %c0_i32 = arith.constant 0 : i32
    %c0_i32_0 = arith.constant 0 : i32
    return %arg0, %c0_i32 : i32, i32
  }
}

</mosaic_0001>

<llo_original>
// kernel: tpu_custom_call.1
$region0: #{tpu_custom_call.1}
  #allocation0 [shape = 'u32[]', space=smem, size = 0x4, offset = 0x4, fixed_abs, tag = 'smem constant byte address 0x4 - core index']
  #allocation1 [shape = 'u32[72,128]{1,0:T(1,128)}', space=vmem, size = 0x9000, scoped, tag = 'internal scratch']
  %s0 = inlined_call_operand.hbm [shape: f32[16,128], index: 0, kind: input, shape index: {}]
  %s1 = inlined_call_operand.hbm [shape: f32[16,128], index: 1, kind: input, shape index: {}]
  %s2 = inlined_call_operand.hbm [shape: f32[16,128], index: 2, kind: input, shape index: {}]
  %s3 = inlined_call_operand.hbm [shape: f32[16,128], index: 3, kind: output, shape index: {}]
  %s4 = sld [smem:[#allocation0]]
  $region34: #{tpu_custom_call.1} parent=0
    _
  %s6 = ssub.s32 1, %s4
  %s7 = scalar_select 0, %s6, %s4
  $region1: #{tpu_custom_call.1} parent=0
    #allocation2 [shape = 'u8[8192]{0}', space=vmem, size = 0x2000, scoped, tag = 'input window, operand 0, single buffered']
    #allocation3 [shape = 's32[1]{0}', space=sflag, size = 0x4, scoped, tag = 'scoped memory for tpu_custom_call.1']
    #allocation4 [shape = 's32[1]{0}', space=sflag, size = 0x4, scoped, tag = 'scoped memory for tpu_custom_call.1']
    #allocation5 [shape = 'u8[8192]{0}', space=vmem, size = 0x2000, scoped, tag = 'input window, operand 1, single buffered']
    #allocation6 [shape = 's32[1]{0}', space=sflag, size = 0x4, scoped, tag = 'scoped memory for tpu_custom_call.1']
    #allocation7 [shape = 'u8[8192]{0}', space=vmem, size = 0x2000, scoped, tag = 'input window, operand 2, single buffered']
    #allocation8 [shape = 'u8[8192]{0}', space=vmem, size = 0x2000, scoped, tag = 'output window, operand 0, single buffered']
    %8 = vsyncpa [#allocation3], 0
    %9 = vsyncpa [#allocation6], 0
    %10 = vsyncpa [#allocation4], 0
    // Predicated region
    $region2: #{tpu_custom_call.1} parent=1 // pred_check
      _
    $region3: #{tpu_custom_call.1} parent=1 // pred_check_branch
      %12 = sbr.rel (0) target = $region5
    $region4: #{tpu_custom_call.1} parent=1 // pred_region
      %14 = vsyncadd [#allocation3], 0
      %s15 = sshll.u32 %s0, 4
      %s16 = int_to_ptr.hbm [resolvable:$true] %s15
      %s17 = sshll.u32 [#allocation2], 4
      %s18 = int_to_ptr.vmem [resolvable:$true] %s17
      %23 = dma.hbm_to_vmem [thread:$0]  %s16, 256, %s18, [#allocation3], 128, 128, 8
    $region5: #{tpu_custom_call.1} parent=1 // pred_fallthru
      _
    // Predicated region
    $region6: #{tpu_custom_call.1} parent=1 // pred_check
      _
    $region7: #{tpu_custom_call.1} parent=1 // pred_check_branch
      %25 = sbr.rel (0) target = $region9
    $region8: #{tpu_custom_call.1} parent=1 // pred_region
      %27 = vsyncadd [#allocation6], 0
      %s28 = sshll.u32 %s1, 4
      %s29 = int_to_ptr.hbm [resolvable:$true] %s28
      %s30 = sshll.u32 [#allocation5], 4
      %s31 = int_to_ptr.vmem [resolvable:$true] %s30
      %36 = dma.hbm_to_vmem [thread:$0]  %s29, 256, %s31, [#allocation6], 128, 128, 8
    $region9: #{tpu_custom_call.1} parent=1 // pred_fallthru
      _
    // Predicated region
    $region10: #{tpu_custom_call.1} parent=1 // pred_check
      _
    $region11: #{tpu_custom_call.1} parent=1 // pred_check_branch
      %38 = sbr.rel (0) target = $region13
    $region12: #{tpu_custom_call.1} parent=1 // pred_region
      %40 = vsyncadd [#allocation6], 0
      %s41 = sshll.u32 %s2, 4
      %s42 = int_to_ptr.hbm [resolvable:$true] %s41
      %s43 = sshll.u32 [#allocation7], 4
      %s44 = int_to_ptr.vmem [resolvable:$true] %s43
      %49 = dma.hbm_to_vmem [thread:$0]  %s42, 256, %s44, [#allocation6], 128, 128, 8
    $region13: #{tpu_custom_call.1} parent=1 // pred_fallthru
      _
    // Predicated region
    $region14: #{tpu_custom_call.1} parent=1 // pred_check
      _
    $region15: #{tpu_custom_call.1} parent=1 // pred_check_branch
      %51 = sbr.rel (0) target = $region17
    $region16: #{tpu_custom_call.1} parent=1 // pred_region
      %53 = dma.done [#allocation3], 256
    $region17: #{tpu_custom_call.1} parent=1 // pred_fallthru
      _
    // Predicated region
    $region18: #{tpu_custom_call.1} parent=1 // pred_check
      _
    $region19: #{tpu_custom_call.1} parent=1 // pred_check_branch
      %55 = sbr.rel (0) target = $region21
    $region20: #{tpu_custom_call.1} parent=1 // pred_region
      %57 = dma.done [#allocation6], 256
    $region21: #{tpu_custom_call.1} parent=1 // pred_fallthru
      _
    // Predicated region
    $region22: #{tpu_custom_call.1} parent=1 // pred_check
      _
    $region23: #{tpu_custom_call.1} parent=1 // pred_check_branch
      %59 = sbr.rel (0) target = $region25
    $region24: #{tpu_custom_call.1} parent=1 // pred_region
      %61 = dma.done [#allocation6], 256
    $region25: #{tpu_custom_call.1} parent=1 // pred_fallthru
      _
    %v62 = vld [vmem:[#allocation2] sm:$0xff]
    %v63 = vld [vmem:[#allocation2 + $0x8] sm:$0xff]
    %v64 = vld [vmem:[#allocation5] sm:$0xff]
    %v65 = vld [vmem:[#allocation5 + $0x8] sm:$0xff]
    %v66 = vadd.f32 %v62, %v64
    %v67 = vadd.f32 %v63, %v65
    %v68 = vld [vmem:[#allocation7] sm:$0xff]
    %v69 = vld [vmem:[#allocation7 + $0x8] sm:$0xff]
    %v70 = vadd.f32 %v66, %v68
    %v71 = vadd.f32 %v67, %v69
    %72 = vst [vmem:[#allocation8] sm:$0xff] %v70
    %73 = vst [vmem:[#allocation8 + $0x8] sm:$0xff] %v71
    // Predicated region
    $region26: #{tpu_custom_call.1} parent=1 // pred_check
      _
    $region27: #{tpu_custom_call.1} parent=1 // pred_check_branch
      %75 = sbr.rel (0) target = $region29
    $region28: #{tpu_custom_call.1} parent=1 // pred_region
      %77 = vsyncadd [#allocation4], 0
      %s78 = sshll.u32 [#allocation8], 4
      %s79 = int_to_ptr.vmem [resolvable:$true] %s78
      %s80 = sshll.u32 %s3, 4
      %s81 = int_to_ptr.hbm [resolvable:$true] %s80
      %86 = dma.vmem_to_hbm [thread:$0]  %s79, 256, %s81, [#allocation4], 128, 128, 8
    $region29: #{tpu_custom_call.1} parent=1 // pred_fallthru
      _
    // Predicated region
    $region30: #{tpu_custom_call.1} parent=1 // pred_check
      _
    $region31: #{tpu_custom_call.1} parent=1 // pred_check_branch
      %88 = sbr.rel (0) target = $region33
    $region32: #{tpu_custom_call.1} parent=1 // pred_region
      %90 = dma.done [#allocation4], 256
    $region33: #{tpu_custom_call.1} parent=1 // pred_fallthru
      _
    %91 = vsyncpa [#allocation3], 1
    %92 = vsyncpa [#allocation6], 1
    %93 = vsyncpa [#allocation4], 1

</llo_original>
